<compile_context>
chip_gen: v5e
topology: v5e:2x2
jax: 0.10.0
libtpu: 0.0.40
codegen_flags: <defaults>
</compile_context>

<pallas_src>
import jax
import jax.numpy as jnp
from jax.experimental import pallas as pl
from jax.experimental.pallas import tpu as pltpu


def highway_kernel(x_ref, w_ref, b_ref, o_ref):
    x = x_ref[...].astype(jnp.float32)                      # (tm, D)
    d = x.shape[-1]
    # One MXU pass for both pre-activations: (tm, D) @ (D, 2D), bf16 in,
    # f32 accumulate.  D is a multiple of 128, so the proj/gate lane split
    # below lands on a 128-lane boundary (no retiling copies).
    z = jnp.dot(x.astype(jnp.bfloat16), w_ref[...],
                preferred_element_type=jnp.float32) + b_ref[...]
    proj = jnp.maximum(z[:, :d], 0.0)                       # relu(x @ Wp^T + bp)
    gate = jax.nn.sigmoid(z[:, d:])                         # sigmoid(x @ Wg^T + bg)
    # gate*proj + (1-gate)*x  ==  x + gate*(proj - x)   (one fewer vmul)
    o_ref[...] = (x + gate * (proj - x)).astype(o_ref.dtype)


def fuse_highway_params(w_proj, b_proj, w_gate, b_gate):
    """One-time parameter fusion (do at parameter setup, NOT per forward call).

    w_*: (D, D) in PyTorch (out_features, in_features) layout.  Returns
    w_cat = [Wp^T | Wg^T] as (D, 2D) bf16 and b_cat = [bp | bg] as (1, 2D) f32.
    """
    D = w_proj.shape[0]
    w_cat = jnp.concatenate([w_proj.T, w_gate.T], axis=1).astype(jnp.bfloat16)
    b_cat = jnp.concatenate([b_proj, b_gate]).reshape(1, 2 * D).astype(jnp.float32)
    return w_cat, b_cat


def _pick_row_tile(R, tm):
    """Row tile: multiple of 8, <= requested tm, and >= 2 grid steps when R allows
    (so v7x's two TensorCores both get work from the 'parallel' row axis)."""
    tm_eff = min(int(tm), ((R + 7) // 8) * 8)
    tm_eff = max(8, (tm_eff // 8) * 8)
    if R > 8:
        half = ((-(-R // 2) + 7) // 8) * 8
        tm_eff = min(tm_eff, max(8, half))
    return tm_eff


def highway(x, w_cat, b_cat, *, tm=2048):
    """x: (R, D).  w_cat: (D, 2D) bf16 fused weights.  b_cat: (1, 2D) f32."""
    R, D = x.shape
    assert w_cat.shape == (D, 2 * D) and b_cat.shape == (1, 2 * D)
    assert D % 128 == 0, "fused proj|gate lane split requires D % 128 == 0"
    # TODO(synk): for D not a multiple of 128, issue two separate dots instead
    # of lane-slicing the fused (tm, 2D) pre-activation.

    tm_eff = _pick_row_tile(R, tm)
    grid = (pl.cdiv(R, tm_eff),)          # no host-side pad: last block is masked

    x_b = jnp.dtype(x.dtype).itemsize
    # VMEM budget: double-buffered x/out tiles + resident weight slab + f32
    # z intermediate + f32 blend temps (×2 headroom), clamped to [32, 64] MiB
    # so it stays inside v7x's 64 MiB physical VMEM.
    vmem = (2 * 2 * tm_eff * D * x_b                # x + out tiles, double-buffered
            + 2 * (D * 2 * D * 2 + 2 * D * 4)       # bf16 weight slab + f32 bias
            + tm_eff * 2 * D * 4                    # f32 pre-activation z
            + tm_eff * D * 4)                       # f32 x copy / blend temps
    vmem_limit = int(min(64 << 20, max(32 << 20, 2 * vmem)))

    cost = pl.CostEstimate(
        flops=int(2 * R * D * (2 * D) + 6 * R * D),
        transcendentals=int(R * D),                             # sigmoid exp
        bytes_accessed=int(2 * R * D * x_b                      # x read + out write
                           + D * 2 * D * 2                      # bf16 weight slab
                           + 2 * D * 4),                        # biases
    )

    return pl.pallas_call(
        highway_kernel,
        out_shape=jax.ShapeDtypeStruct((R, D), x.dtype),
        grid_spec=pltpu.PrefetchScalarGridSpec(
            num_scalar_prefetch=0,
            grid=grid,
            in_specs=[
                pl.BlockSpec((tm_eff, D), lambda i: (i, 0)),     # x row tile
                pl.BlockSpec((D, 2 * D), lambda i: (0, 0)),      # [Wp^T|Wg^T] resident
                pl.BlockSpec((1, 2 * D), lambda i: (0, 0)),      # [bp|bg] resident
            ],
            out_specs=pl.BlockSpec((tm_eff, D), lambda i: (i, 0)),
        ),
        compiler_params=pltpu.CompilerParams(
            dimension_semantics=("parallel",),
            vmem_limit_bytes=vmem_limit),
        cost_estimate=cost,
    )(x, w_cat, b_cat)


def highway_ref(x, w_proj, b_proj, w_gate, b_gate):
    proj = jnp.maximum(x @ w_proj.T + b_proj, 0.0)
    gate = jax.nn.sigmoid(x @ w_gate.T + b_gate)
    return gate * proj + (1.0 - gate) * x


if __name__ == "__main__":
    key = jax.random.PRNGKey(0)
    D = 128          # input_size (e_word)
    batch, seq = 2, 8
    R = batch * seq  # flattened batch rows of conv outputs

    k_x, k_wp, k_bp, k_wg, k_bg = jax.random.split(key, 5)
    # Deterministic init mimicking nn.Linear: U(-1/sqrt(D), 1/sqrt(D))
    bound = 1.0 / jnp.sqrt(jnp.float32(D))
    x = jax.random.normal(k_x, (R, D), dtype=jnp.float32)
    w_proj = jax.random.uniform(k_wp, (D, D), jnp.float32, -bound, bound)
    b_proj = jax.random.uniform(k_bp, (D,), jnp.float32, -bound, bound)
    w_gate = jax.random.uniform(k_wg, (D, D), jnp.float32, -bound, bound)
    b_gate = jax.random.uniform(k_bg, (D,), jnp.float32, -bound, bound)

    # Parameter fusion happens ONCE here (setup time), not per forward call.
    w_cat, b_cat = fuse_highway_params(w_proj, b_proj, w_gate, b_gate)

    out = highway(x, w_cat, b_cat)
    out = jax.block_until_ready(out)

    ref = highway_ref(x, w_proj, b_proj, w_gate, b_gate)
    assert out.shape == (R, D)
    # bf16 matmul (f32 accumulate) → loosened tolerance vs the f32 reference.
    assert jnp.allclose(out, ref, atol=3e-2, rtol=3e-2), "mismatch vs reference"
    print("KERNEL_OK")
</pallas_src>

<mosaic_0001>
module attributes {stable_mosaic.version = 11 : i64} {
  func.func @highway_kernel(%arg0: i32, %arg1: memref<8x128xf32, #tpu.memory_space<vmem>>, %arg2: memref<128x256xbf16, #tpu.memory_space<vmem>>, %arg3: memref<1x256xf32, #tpu.memory_space<vmem>>, %arg4: memref<8x128xf32, #tpu.memory_space<vmem>>) attributes {dimension_semantics = [#tpu.dimension_semantics<parallel>], iteration_bounds = array<i64: 2>, scalar_prefetch = 0 : i64, scratch_operands = 0 : i64, tpu.core_type = #tpu.core_type<tc>, window_params = [{transform_indices = @transform_0, window_bounds = array<i64: 8, 128>}, {pipeline_mode = #tpu.pipeline_mode<synchronous>, transform_indices = @transform_1, window_bounds = array<i64: 128, 256>}, {pipeline_mode = #tpu.pipeline_mode<synchronous>, transform_indices = @transform_2, window_bounds = array<i64: 1, 256>}, {transform_indices = @transform_3, window_bounds = array<i64: 8, 128>}]} {
    %c0 = arith.constant 0 : index
    %c0_0 = arith.constant 0 : index
    %0 = vector.load %arg1[%c0, %c0_0] : memref<8x128xf32, #tpu.memory_space<vmem>>, vector<8x128xf32>
    %1 = arith.truncf %0 : vector<8x128xf32> to vector<8x128xbf16>
    %c0_1 = arith.constant 0 : index
    %c0_2 = arith.constant 0 : index
    %2 = vector.load %arg2[%c0_1, %c0_2] : memref<128x256xbf16, #tpu.memory_space<vmem>>, vector<128x256xbf16>
    %cst = arith.constant dense<0.000000e+00> : vector<8x256xf32>
    %3 = tpu.matmul %1, %2, %cst {dimension_numbers = #tpu.dot_dimension_numbers<[1], [0], [0], [1], [0, 0, 1, 1], [], []>} : vector<8x128xbf16>, vector<128x256xbf16>, vector<8x256xf32> -> vector<8x256xf32>
    %c0_3 = arith.constant 0 : index
    %c0_4 = arith.constant 0 : index
    %4 = vector.load %arg3[%c0_3, %c0_4] : memref<1x256xf32, #tpu.memory_space<vmem>>, vector<1x256xf32>
    %5 = vector.broadcast %4 : vector<1x256xf32> to vector<8x256xf32>
    %6 = arith.addf %3, %5 : vector<8x256xf32>
    %7 = vector.extract_strided_slice %6 {offsets = [0, 0], sizes = [8, 128], strides = [1, 1]} : vector<8x256xf32> to vector<8x128xf32>
    %cst_5 = arith.constant 0.000000e+00 : f32
    %8 = vector.broadcast %cst_5 : f32 to vector<8x128xf32>
    %9 = arith.maximumf %7, %8 : vector<8x128xf32>
    %10 = vector.extract_strided_slice %6 {offsets = [0, 128], sizes = [8, 128], strides = [1, 1]} : vector<8x256xf32> to vector<8x128xf32>
    %11 = arith.negf %10 : vector<8x128xf32>
    %12 = math.exp %11 : vector<8x128xf32>
    %cst_6 = arith.constant 1.000000e+00 : f32
    %13 = vector.broadcast %cst_6 : f32 to vector<8x128xf32>
    %14 = arith.addf %13, %12 : vector<8x128xf32>
    %15 = arith.divf %13, %14 : vector<8x128xf32>
    %16 = arith.subf %9, %0 : vector<8x128xf32>
    %17 = arith.mulf %15, %16 : vector<8x128xf32>
    %18 = arith.addf %0, %17 : vector<8x128xf32>
    %c0_7 = arith.constant 0 : index
    %c0_8 = arith.constant 0 : index
    %19 = vector.load %arg4[%c0_7, %c0_8] : memref<8x128xf32, #tpu.memory_space<vmem>>, vector<8x128xf32>
    tpu.vector_store %arg4[%c0_7, %c0_8], %18 {strides = array<i32>} : memref<8x128xf32, #tpu.memory_space<vmem>>, vector<8x128xf32>,
    return
  }
  func.func @transform_0(%arg0: i32) -> (i32, i32) {
    %c0_i32 = arith.constant 0 : i32
    %c0_i32_0 = arith.constant 0 : i32
    return %arg0, %c0_i32 : i32, i32
  }
  func.func @transform_1(%arg0: i32) -> (i32, i32) {
    %c0_i32 = arith.constant 0 : i32
    %c0_i32_0 = arith.constant 0 : i32
    %c0_i32_1 = arith.constant 0 : i32
    return %c0_i32, %c0_i32_0 : i32, i32
  }
  func.func @transform_2(%arg0: i32) -> (i32, i32) {
    %c0_i32 = arith.constant 0 : i32
    %c0_i32_0 = arith.constant 0 : i32
    %c0_i32_1 = arith.constant 0 : i32
    return %c0_i32, %c0_i32_0 : i32, i32
  }
  func.func @transform_3(%arg0: i32) -> (i32, i32) {
    %c0_i32 = arith.constant 0 : i32
    %c0_i32_0 = arith.constant 0 : i32
    return %arg0, %c0_i32 : i32, i32
  }
}

</mosaic_0001>

<llo_original>
// kernel: tpu_custom_call.1
$region0: #{tpu_custom_call.1}
  #allocation0 [shape = 'u32[]', space=smem, size = 0x4, offset = 0x4, fixed_abs, tag = 'smem constant byte address 0x4 - core index']
  #allocation1 [shape = 'u32[72,128]{1,0:T(1,128)}', space=vmem, size = 0x9000, scoped, tag = 'internal scratch']
  %s0 = inlined_call_operand.hbm [shape: f32[16,128], index: 0, kind: input, shape index: {}]
  %s1 = inlined_call_operand.hbm [shape: bf16[128,256], index: 1, kind: input, shape index: {}]
  %s2 = inlined_call_operand.hbm [shape: f32[1,256], index: 2, kind: input, shape index: {}]
  %s3 = inlined_call_operand.hbm [shape: f32[16,128], index: 3, kind: output, shape index: {}]
  %s4 = sld [smem:[#allocation0]]
  $region57: #{tpu_custom_call.1} parent=0
    _
  %s6 = ssub.s32 1, %s4
  %s7 = scalar_select 0, %s6, %s4
  $region1: #{tpu_custom_call.1} parent=0
    #allocation2 [shape = 'u8[8192]{0}', space=vmem, size = 0x2000, scoped, tag = 'input window, operand 0']
    #allocation3 [shape = 's32[2]{0}', space=sflag, size = 0x8, scoped, tag = 'scoped memory for tpu_custom_call.1']
    #allocation4 [shape = 's32[2]{0}', space=sflag, size = 0x8, scoped, tag = 'scoped memory for tpu_custom_call.1']
    #allocation5 [shape = 'u8[65536]{0}', space=vmem, size = 0x10000, scoped, tag = 'input window, operand 1, single buffered']
    #allocation6 [shape = 's32[1]{0}', space=sflag, size = 0x4, scoped, tag = 'scoped memory for tpu_custom_call.1']
    #allocation7 [shape = 'u8[1024]{0}', space=vmem, size = 0x400, scoped, tag = 'input window, operand 2, single buffered']
    #allocation8 [shape = 'u8[8192]{0}', space=vmem, size = 0x2000, scoped, tag = 'output window, operand 0']
    %8 = vsyncpa [#allocation3], 0
    %s9 = scalar_lea.sflag [#allocation3], 1
    %10 = vsyncpa %s9, 0
    %11 = vsyncpa [#allocation6], 0
    %12 = vsyncpa [#allocation4], 0
    %s13 = scalar_lea.sflag [#allocation4], 1
    %14 = vsyncpa %s13, 0
    loop: start=0, step=1, limit=4
    $region2: #{tpu_custom_call.1} parent=1 // loop_pre_header
      _
    $region3: #{tpu_custom_call.1} parent=1 // loop_header
      %s16 = sphi 0, %s20
      %p17 = scmp.ge.s32.totalorder %s16, 4
      %s26 = sphi 0, %s28
      %s29 = sphi 0, %s26
      %s30 = sphi 0, %s29
      %s46 = sphi 0, %s30
      %s50 = sphi 0, %s50
      %s52 = sphi 0, %s50
      %s53 = sphi 0, %s52
      %s67 = sphi 0, %s53
      %s71 = sphi 0, %s71
      %s73 = sphi 0, %s71
      %s74 = sphi 0, %s73
      %s88 = sphi 0, %s74
      %s94 = sphi 0, %s96
      %s97 = sphi 0, %s94
      %s98 = sphi 0, %s97
      %s114 = sphi 0, %s98
    $region4: #{tpu_custom_call.1} parent=1 // loop_header_branch
      %19 = sbr.rel (%p17) target = $region8
    $region5: #{tpu_custom_call.1} parent=1 // loop_body
      %s21 = ssub.s32 %s16, 1
      %s22 = ssub.s32 %s16, 2
      %s23 = sadd.s32 %s16, 1
      %s24 = ssub.s32 %s16, %s23
      %p25 = scmp.eq.s32.totalorder %s24, 0
      %s27 = sadd.s32 %s26, 1
      %s28 = scalar_select %p25, %s26, %s27
      %p31 = pneg %p25
      %p32 = scmp.eq.s32.totalorder %s16, 1
      %p33 = por %p31, %p32
      %p34 = scmp.ne.s32.totalorder %s26, %s29
      %p35 = scmp.eq.s32.totalorder %s16, 0
      %p36 = por %p34, %p35
      %p37 = scmp.ne.s32.totalorder %s26, %s29
      %p38 = scmp.eq.s32.totalorder %s21, 1
      %p39 = por %p37, %p38
      %p40 = scmp.ne.s32.totalorder %s29, %s30
      %p41 = scmp.eq.s32.totalorder %s21, 0
      %p42 = por %p40, %p41
      %p43 = scmp.ne.s32.totalorder %s29, %s30
      %p44 = scmp.eq.s32.totalorder %s22, 1
      %p45 = por %p43, %p44
      %p47 = scmp.ne.s32.totalorder %s30, %s46
      %p48 = scmp.eq.s32.totalorder %s22, 0
      %p49 = por %p47, %p48
      %s51 = sadd.s32 %s50, 1
      %p54 = scmp.eq.s32.totalorder %s16, 1
      %p55 = scmp.ne.s32.totalorder %s50, %s52
      %p56 = scmp.eq.s32.totalorder %s16, 0
      %p57 = por %p55, %p56
      %p58 = scmp.ne.s32.totalorder %s50, %s52
      %p59 = scmp.eq.s32.totalorder %s21, 1
      %p60 = por %p58, %p59
      %p61 = scmp.ne.s32.totalorder %s52, %s53
      %p62 = scmp.eq.s32.totalorder %s21, 0
      %p63 = por %p61, %p62
      %p64 = scmp.ne.s32.totalorder %s52, %s53
      %p65 = scmp.eq.s32.totalorder %s22, 1
      %p66 = por %p64, %p65
      %p68 = scmp.ne.s32.totalorder %s53, %s67
      %p69 = scmp.eq.s32.totalorder %s22, 0
      %p70 = por %p68, %p69
      %s72 = sadd.s32 %s71, 1
      %p75 = scmp.eq.s32.totalorder %s16, 1
      %p76 = scmp.ne.s32.totalorder %s71, %s73
      %p77 = scmp.eq.s32.totalorder %s16, 0
      %p78 = por %p76, %p77
      %p79 = scmp.ne.s32.totalorder %s71, %s73
      %p80 = scmp.eq.s32.totalorder %s21, 1
      %p81 = por %p79, %p80
      %p82 = scmp.ne.s32.totalorder %s73, %s74
      %p83 = scmp.eq.s32.totalorder %s21, 0
      %p84 = por %p82, %p83
      %p85 = scmp.ne.s32.totalorder %s73, %s74
      %p86 = scmp.eq.s32.totalorder %s22, 1
      %p87 = por %p85, %p86
      %p89 = scmp.ne.s32.totalorder %s74, %s88
      %p90 = scmp.eq.s32.totalorder %s22, 0
      %p91 = por %p89, %p90
      %s92 = ssub.s32 %s16, %s23
      %p93 = scmp.eq.s32.totalorder %s92, 0
      %s95 = sadd.s32 %s94, 1
      %s96 = scalar_select %p93, %s94, %s95
      %p99 = pneg %p93
      %p100 = scmp.eq.s32.totalorder %s16, 1
      %p101 = por %p99, %p100
      %p102 = scmp.ne.s32.totalorder %s94, %s97
      %p103 = scmp.eq.s32.totalorder %s16, 0
      %p104 = por %p102, %p103
      %p105 = scmp.ne.s32.totalorder %s94, %s97
      %p106 = scmp.eq.s32.totalorder %s21, 1
      %p107 = por %p105, %p106
      %p108 = scmp.ne.s32.totalorder %s97, %s98
      %p109 = scmp.eq.s32.totalorder %s21, 0
      %p110 = por %p108, %p109
      %p111 = scmp.ne.s32.totalorder %s97, %s98
      %p112 = scmp.eq.s32.totalorder %s22, 1
      %p113 = por %p111, %p112
      %p115 = scmp.ne.s32.totalorder %s98, %s114
      %p116 = scmp.eq.s32.totalorder %s22, 0
      %p117 = por %p115, %p116
      %p118 = scmp.le.s32.totalorder 1, %s16
      %p119 = scmp.lt.s32.totalorder %s16, 3
      %p120 = pnand %p118, %p119
      %p121 = pneg %p120
      // Predicated region
      $region9: #{tpu_custom_call.1} parent=5 // pred_check
        _
      $region10: #{tpu_custom_call.1} parent=5 // pred_check_branch
        %123 = sbr.rel (%p120) target = $region12
      $region11: #{tpu_custom_call.1} parent=5 // pred_region
        %s124 = ssub.s32 %s16, 1
        // Predicated region
        $region13: #{tpu_custom_call.1} parent=11 // pred_check
          %p125 = pneg %p63
        $region14: #{tpu_custom_call.1} parent=11 // pred_check_branch
          %127 = sbr.rel (%p125) target = $region16
        $region15: #{tpu_custom_call.1} parent=11 // pred_region
          %129 = vsyncadd [#allocation6], 0
          %s130 = sshll.u32 %s1, 4
          %s131 = int_to_ptr.hbm [resolvable:$true] %s130
          %s132 = sshll.u32 [#allocation5], 4
          %s133 = int_to_ptr.vmem [resolvable:$true] %s132
          %138 = dma.hbm_to_vmem [thread:$0]  %s131, 2048, %s133, [#allocation6], 128, 128, 8
        $region16: #{tpu_custom_call.1} parent=11 // pred_fallthru
          _
        // Predicated region
        $region17: #{tpu_custom_call.1} parent=11 // pred_check
          %p139 = pneg %p84
        $region18: #{tpu_custom_call.1} parent=11 // pred_check_branch
          %141 = sbr.rel (%p139) target = $region20
        $region19: #{tpu_custom_call.1} parent=11 // pred_region
          %143 = vsyncadd [#allocation6], 0
          %s145 = sshll.u32 %s2, 4
          %s146 = int_to_ptr.hbm [resolvable:$true] %s145
          %s147 = sshll.u32 [#allocation7], 4
          %s148 = int_to_ptr.vmem [resolvable:$true] %s147
          %150 = dma.hbm_to_vmem [thread:$0]  %s146, 32, %s148, [#allocation6]
        $region20: #{tpu_custom_call.1} parent=11 // pred_fallthru
          _
      $region12: #{tpu_custom_call.1} parent=5 // pred_fallthru
        _
      %p151 = scmp.lt.s32.totalorder %s16, 2
      // Predicated region
      $region21: #{tpu_custom_call.1} parent=5 // pred_check
        %p152 = pneg %p151
      $region22: #{tpu_custom_call.1} parent=5 // pred_check_branch
        %154 = sbr.rel (%p152) target = $region24
      $region23: #{tpu_custom_call.1} parent=5 // pred_region
        // Predicated region
        $region25: #{tpu_custom_call.1} parent=23 // pred_check
          %p155 = pneg %p36
        $region26: #{tpu_custom_call.1} parent=23 // pred_check_branch
          %157 = sbr.rel (%p155) target = $region28
        $region27: #{tpu_custom_call.1} parent=23 // pred_region
          %s158 = sand.u32 %s26, 1
          %s159 = scalar_lea.sflag [#allocation3], %s158
          %s160 = sand.u32 %s26, 1
          %s161 = smul.addr %s160, 8
          %s162 = scalar_lea.vmem [#allocation2], %s161
          %164 = vsyncadd %s159, 0
          %s165 = smul.addr %s16, 8
          %s166 = scalar_lea.hbm %s0, %s165
          %s168 = sshll.u32 %s166, 4
          %s169 = int_to_ptr.hbm [resolvable:$true] %s168
          %s170 = sshll.u32 %s162, 4
          %s171 = int_to_ptr.vmem [resolvable:$true] %s170
          %173 = dma.hbm_to_vmem [thread:$0]  %s169, 128, %s171, %s159
        $region28: #{tpu_custom_call.1} parent=23 // pred_fallthru
          _
      $region24: #{tpu_custom_call.1} parent=5 // pred_fallthru
        _
      %p174 = scmp.le.s32.totalorder 1, %s16
      %p175 = scmp.lt.s32.totalorder %s16, 3
      %p176 = pnand %p174, %p175
      %p177 = pneg %p176
      // Predicated region
      $region29: #{tpu_custom_call.1} parent=5 // pred_check
        _
      $region30: #{tpu_custom_call.1} parent=5 // pred_check_branch
        %179 = sbr.rel (%p176) target = $region32
      $region31: #{tpu_custom_call.1} parent=5 // pred_region
        %s180 = ssub.s32 %s16, 1
        %s181 = sand.u32 %s29, 1
        %s182 = scalar_lea.sflag [#allocation3], %s181
        %s183 = sand.u32 %s29, 1
        %s184 = smul.addr %s183, 8
        %s185 = scalar_lea.vmem [#allocation2], %s184
        // Predicated region
        $region33: #{tpu_custom_call.1} parent=31 // pred_check
          %p186 = pneg %p42
        $region34: #{tpu_custom_call.1} parent=31 // pred_check_branch
          %188 = sbr.rel (%p186) target = $region36
        $region35: #{tpu_custom_call.1} parent=31 // pred_region
          %190 = dma.done %s182, 128
        $region36: #{tpu_custom_call.1} parent=31 // pred_fallthru
          _
        // Predicated region
        $region37: #{tpu_custom_call.1} parent=31 // pred_check
          %p191 = pneg %p63
        $region38: #{tpu_custom_call.1} parent=31 // pred_check_branch
          %193 = sbr.rel (%p191) target = $region40
        $region39: #{tpu_custom_call.1} parent=31 // pred_region
          %195 = dma.done [#allocation6], 2048
        $region40: #{tpu_custom_call.1} parent=31 // pred_fallthru
          _
        // Predicated region
        $region41: #{tpu_custom_call.1} parent=31 // pred_check
          %p196 = pneg %p84
        $region42: #{tpu_custom_call.1} parent=31 // pred_check_branch
          %198 = sbr.rel (%p196) target = $region44
        $region43: #{tpu_custom_call.1} parent=31 // pred_region
          %200 = dma.done [#allocation6], 32
        $region44: #{tpu_custom_call.1} parent=31 // pred_fallthru
          _
        %s201 = sand.u32 %s29, 1
        %s202 = scalar_lea.sflag [#allocation3], %s201
        %s203 = sand.u32 %s29, 1
        %s204 = smul.addr %s203, 8
        %s205 = scalar_lea.vmem [#allocation2], %s204
        %p206 = pneg %p42
        %p207 = pneg %p39
        %p208 = pneg %p63
        %p209 = pneg %p60
        %p210 = pneg %p84
        %p211 = pneg %p81
        %p212 = pneg %p110
        %p213 = pneg %p107
        %s214 = sand.u32 %s97, 1
        %s215 = scalar_lea.sflag [#allocation4], %s214
        %s216 = sand.u32 %s97, 1
        %s217 = smul.addr %s216, 8
        %s218 = scalar_lea.vmem [#allocation8], %s217
        %v219 = vld [vmem:[%s185] sm:$0xff]
        %v220 = vpack.c.bf16 %v219, %v219
        %v221 = vld [vmem:[#allocation5] sm:$0xff]
        %v222 = vld [vmem:[#allocation5 + $0x8] sm:$0xff]
        %v223 = vld [vmem:[#allocation5 + $0x10] sm:$0xff]
        %v224 = vld [vmem:[#allocation5 + $0x18] sm:$0xff]
        %v225 = vld [vmem:[#allocation5 + $0x20] sm:$0xff]
        %v226 = vld [vmem:[#allocation5 + $0x28] sm:$0xff]
        %v227 = vld [vmem:[#allocation5 + $0x30] sm:$0xff]
        %v228 = vld [vmem:[#allocation5 + $0x38] sm:$0xff]
        %v229 = vld [vmem:[#allocation5 + $0x40] sm:$0xff]
        %v230 = vld [vmem:[#allocation5 + $0x48] sm:$0xff]
        %v231 = vld [vmem:[#allocation5 + $0x50] sm:$0xff]
        %v232 = vld [vmem:[#allocation5 + $0x58] sm:$0xff]
        %v233 = vld [vmem:[#allocation5 + $0x60] sm:$0xff]
        %v234 = vld [vmem:[#allocation5 + $0x68] sm:$0xff]
        %v235 = vld [vmem:[#allocation5 + $0x70] sm:$0xff]
        %v236 = vld [vmem:[#allocation5 + $0x78] sm:$0xff]
        %v237 = vld [vmem:[#allocation7] sm:$0x3]
        %v239 = vperm.slane %v237, 0
        %v240 = vperm.slane %v237, 1
        %v259 = vunpack.c.l.b16 %v221
        %v260 = vunpack.c.h.b16 %v221
        %v261 = vunpack.c.l.b16 %v222
        %v262 = vunpack.c.h.b16 %v222
        %v263 = vunpack.c.l.b16 %v223
        %v264 = vunpack.c.h.b16 %v223
        %v265 = vunpack.c.l.b16 %v224
        %v266 = vunpack.c.h.b16 %v224
        %v267 = vunpack.c.l.b16 %v225
        %v268 = vunpack.c.h.b16 %v225
        %v269 = vunpack.c.l.b16 %v226
        %v270 = vunpack.c.h.b16 %v226
        %v271 = vunpack.c.l.b16 %v227
        %v272 = vunpack.c.h.b16 %v227
        %v273 = vunpack.c.l.b16 %v228
        %v274 = vunpack.c.h.b16 %v228
        %v275 = vunpack.c.l.b16 %v229
        %v276 = vunpack.c.h.b16 %v229
        %v277 = vunpack.c.l.b16 %v230
        %v278 = vunpack.c.h.b16 %v230
        %v279 = vunpack.c.l.b16 %v231
        %v280 = vunpack.c.h.b16 %v231
        %v281 = vunpack.c.l.b16 %v232
        %v282 = vunpack.c.h.b16 %v232
        %v283 = vunpack.c.l.b16 %v233
        %v284 = vunpack.c.h.b16 %v233
        %v285 = vunpack.c.l.b16 %v234
        %v286 = vunpack.c.h.b16 %v234
        %v287 = vunpack.c.l.b16 %v235
        %v288 = vunpack.c.h.b16 %v235
        %v289 = vunpack.c.l.b16 %v236
        %v290 = vunpack.c.h.b16 %v236
        %v291 = vpack.c.b16 %v261, %v259
        %v292 = vpack.c.b16 %v262, %v260
        %v293 = vpack.c.b16 %v265, %v263
        %v294 = vpack.c.b16 %v266, %v264
        %v295 = vpack.c.b16 %v269, %v267
        %v296 = vpack.c.b16 %v270, %v268
        %v297 = vpack.c.b16 %v273, %v271
        %v298 = vpack.c.b16 %v274, %v272
        %v299 = vpack.c.b16 %v277, %v275
        %v300 = vpack.c.b16 %v278, %v276
        %v301 = vpack.c.b16 %v281, %v279
        %v302 = vpack.c.b16 %v282, %v280
        %v303 = vpack.c.b16 %v285, %v283
        %v304 = vpack.c.b16 %v286, %v284
        %v305 = vpack.c.b16 %v289, %v287
        %v306 = vpack.c.b16 %v290, %v288
        %323 = vmatpush.bf16.msra.mxu0 %v305
        %324 = vmatpush.bf16.msra.mxu0 %v303
        %325 = vmatpush.bf16.msra.mxu0 %v301
        %326 = vmatpush.bf16.msra.mxu0 %v299
        %327 = vmatpush.bf16.msra.mxu0 %v297
        %328 = vmatpush.bf16.msra.mxu0 %v295
        %329 = vmatpush.bf16.msra.mxu0 %v293
        %330 = vmatpush.bf16.msra.mxu0 %v291
        %331 = vmatmul.bf16.gmra.mxu0 %v220
        %v332 = vpop.f32.mrf.mxu0
        %v333 = vadd.f32 %v239, %v332
        %v334 = vpop.f32.mrf.mxu0
        %335 = vdwg.mxu0
        %336 = vmatpush.bf16.msra.mxu0 %v306
        %337 = vmatpush.bf16.msra.mxu0 %v304
        %338 = vmatpush.bf16.msra.mxu0 %v302
        %339 = vmatpush.bf16.msra.mxu0 %v300
        %340 = vmatpush.bf16.msra.mxu0 %v298
        %341 = vmatpush.bf16.msra.mxu0 %v296
        %342 = vmatpush.bf16.msra.mxu0 %v294
        %343 = vmatpush.bf16.msra.mxu0 %v292
        %344 = vmatmul.bf16.gmra.mxu0 %v220
        %v345 = vpop.f32.mrf.mxu0
        %v346 = vadd.f32 %v240, %v345
        %v347 = vpop.f32.mrf.mxu0
        %348 = vdwg.mxu0
        %v349 = vmax.f32 %v333, 0.0
        %v350 = vxor.u32 %v346, 2147483648
        %v351 = vmul.f32 %v350, 1.442695
        %v352 = vpow.pop %v351
        %v353 = vadd.f32 %v352, 1.0
        %v354 = vrcp.pop %v353
        %v355 = vmul.f32 %v353, %v354
        %v356 = vsub.f32 1.0, %v355
        %v357 = vmul.f32 %v354, %v356
        %v358 = vadd.f32 %v354, %v357
        %vm359 = vweird.f32 %v353
        %vm360 = vweird.f32 %v354
        %vm361 = vmor %vm359, %vm360
        %v362 = vsel %vm361, %v354, %v358
        %v363 = vand.u32 2147483647, %v353
        %vm364 = vcmp.eq.f32.partialorder %v363, 8.507059e+37
        %v365 = vand.u32 %v353, 2147483648
        %v366 = vor.u32 1.1754944e-38, %v365
        %v367 = vsel %vm364, %v366, %v362
        %v368 = vmul.f32 1.0, %v367
        %v369 = vsub.f32 %v349, %v219
        %v370 = vmul.f32 %v368, %v369
        %v371 = vadd.f32 %v219, %v370
        %372 = vst [vmem:[%s218] sm:$0xff] %v371
        %s373 = sand.u32 %s97, 1
        %s374 = scalar_lea.sflag [#allocation4], %s373
        %s375 = sand.u32 %s97, 1
        %s376 = smul.addr %s375, 8
        %s377 = scalar_lea.vmem [#allocation8], %s376
        // Predicated region
        $region45: #{tpu_custom_call.1} parent=31 // pred_check
          %p378 = pneg %p107
        $region46: #{tpu_custom_call.1} parent=31 // pred_check_branch
          %380 = sbr.rel (%p378) target = $region48
        $region47: #{tpu_custom_call.1} parent=31 // pred_region
          %382 = vsyncadd %s374, 0
          %s383 = smul.addr %s21, 8
          %s384 = scalar_lea.hbm %s3, %s383
          %s386 = sshll.u32 %s377, 4
          %s387 = int_to_ptr.vmem [resolvable:$true] %s386
          %s388 = sshll.u32 %s384, 4
          %s389 = int_to_ptr.hbm [resolvable:$true] %s388
          %391 = dma.vmem_to_hbm [thread:$0]  %s387, 128, %s389, %s374
        $region48: #{tpu_custom_call.1} parent=31 // pred_fallthru
          _
      $region32: #{tpu_custom_call.1} parent=5 // pred_fallthru
        _
      %p392 = scmp.le.s32.totalorder 2, %s16
      // Predicated region
      $region49: #{tpu_custom_call.1} parent=5 // pred_check
        %p393 = pneg %p392
      $region50: #{tpu_custom_call.1} parent=5 // pred_check_branch
        %395 = sbr.rel (%p393) target = $region52
      $region51: #{tpu_custom_call.1} parent=5 // pred_region
        %s396 = ssub.s32 %s16, 2
        // Predicated region
        $region53: #{tpu_custom_call.1} parent=51 // pred_check
          %p397 = pneg %p113
        $region54: #{tpu_custom_call.1} parent=51 // pred_check_branch
          %399 = sbr.rel (%p397) target = $region56
        $region55: #{tpu_custom_call.1} parent=51 // pred_region
          %s400 = sand.u32 %s98, 1
          %s401 = scalar_lea.sflag [#allocation4], %s400
          %s402 = sand.u32 %s98, 1
          %s403 = smul.addr %s402, 8
          %s404 = scalar_lea.vmem [#allocation8], %s403
          %406 = dma.done %s401, 128
        $region56: #{tpu_custom_call.1} parent=51 // pred_fallthru
          _
      $region52: #{tpu_custom_call.1} parent=5 // pred_fallthru
        _
    $region6: #{tpu_custom_call.1} parent=1 // loop_footer
      %s20 = sadd.s32 1, %s16
    $region7: #{tpu_custom_call.1} parent=1 // loop_footer_branch
      %15 = sbr.rel target = $region3
    $region8: #{tpu_custom_call.1} parent=1 // loop_exit
      _
    %407 = vsyncpa [#allocation3], 1
    %s408 = scalar_lea.sflag [#allocation3], 1
    %409 = vsyncpa %s408, 1
    %410 = vsyncpa [#allocation6], 1
    %411 = vsyncpa [#allocation4], 1
    %s412 = scalar_lea.sflag [#allocation4], 1
    %413 = vsyncpa %s412, 1

</llo_original>
